<compile_context>
chip_gen: v5e
topology: v5e:2x2
jax: 0.10.0
libtpu: 0.0.40
codegen_flags: <defaults>
</compile_context>

<pallas_src>
import functools

import jax
import jax.numpy as jnp
import numpy as np
from jax.experimental import pallas as pl
from jax.experimental.pallas import tpu as pltpu

F32 = jnp.float32
BF16 = jnp.bfloat16


# ------------------------------ prologue kernel -----------------------------
def _prologue_kernel(x_ref, gw1_ref, lw1_ref, lb1_ref, lw2_ref, lb2_ref,
                     xw1_ref, l2_ref):
    """Grid (i,): per row tile compute XW1 = X @ gw1 and the full linear branch
    l2 = relu(relu(X @ lw1 + lb1) @ lw2 + lb2).  Dots kept separate (no fused
    [gw1|lw1] slab) so the live set stays well under the 64-vreg budget."""
    x = x_ref[...]                                                # (TM, DIN_P) bf16
    xw1_ref[...] = jnp.dot(x, gw1_ref[...],
                           preferred_element_type=F32).astype(xw1_ref.dtype)
    l1 = jnp.maximum(
        jnp.dot(x, lw1_ref[...], preferred_element_type=F32) + lb1_ref[...], 0.0)
    l2 = jnp.maximum(
        jnp.dot(l1.astype(BF16), lw2_ref[...],
                preferred_element_type=F32) + lb2_ref[...], 0.0)
    l2_ref[...] = l2.astype(l2_ref.dtype)


# ------------------------------ stage 1 kernel ------------------------------
def _stage1_kernel(a_ref, xw1_ref, gb1_ref, gw2_ref, g1w2_ref, acc_ref):
    """Grid (i, k): pure streaming acc += A[i,k] @ XW1[k]; at the last k the
    GCN layer-1 is finalized and layer-2's weight matmul is fused in so the
    inter-stage tensor is already g1 @ gw2."""
    k = pl.program_id(1)

    @pl.when(k == 0)
    def _init():
        acc_ref[...] = jnp.zeros_like(acc_ref)

    acc_ref[...] += jnp.dot(a_ref[...], xw1_ref[...], preferred_element_type=F32)

    @pl.when(k == pl.num_programs(1) - 1)
    def _finalize():
        g1 = jnp.maximum(acc_ref[...] + gb1_ref[...], 0.0)
        g1w2_ref[...] = jnp.dot(g1.astype(BF16), gw2_ref[...],
                                preferred_element_type=F32).astype(g1w2_ref.dtype)


# ------------------------------ stage 2 kernel ------------------------------
def _stage2_kernel(a_ref, g1w2_ref, l2_ref, gb2_ref, wo_lin_ref, wo_gcn_ref,
                   bo_ref, logits_ref, soft_ref, acc_ref, *, dim_out):
    """Grid (i, k): acc += A[i,k] @ g1w2[k]; at last k -> g2, logits, softmax."""
    k = pl.program_id(1)

    @pl.when(k == 0)
    def _init():
        acc_ref[...] = jnp.zeros_like(acc_ref)

    acc_ref[...] += jnp.dot(a_ref[...], g1w2_ref[...], preferred_element_type=F32)

    @pl.when(k == pl.num_programs(1) - 1)
    def _finalize():
        g2 = jnp.maximum(acc_ref[...] + gb2_ref[...], 0.0)           # (TM, H2P) f32
        # Final Linear over cat([lin_h, graph_h], dim=1) as a split weight.
        logits = (jnp.dot(l2_ref[...], wo_lin_ref[...], preferred_element_type=F32)
                  + jnp.dot(g2.astype(BF16), wo_gcn_ref[...],
                            preferred_element_type=F32)
                  + bo_ref[...])
        logits_ref[...] = logits

        # Softmax over dim=1, masking the padded lanes (cols >= dim_out).
        col = jax.lax.broadcasted_iota(jnp.int32, logits.shape, 1)
        valid = col < dim_out
        masked = jnp.where(valid, logits, -1e30)
        m = jnp.max(masked, axis=1, keepdims=True)
        e = jnp.where(valid, jnp.exp(logits - m), 0.0)
        denom = jnp.sum(e, axis=1, keepdims=True)
        soft_ref[...] = e * pl.reciprocal(denom, approx=True)


# --------------------------------- wrapper ----------------------------------
def _ru(v, m):
    return (v + m - 1) // m * m


def _pad2(x, rows, cols):
    r, c = x.shape
    return jnp.pad(x, ((0, rows - r), (0, cols - c)))


def gcnot_forward(x, a_hat, params):
    """GCNOT forward: prologue + two row-tiled streaming A-contraction calls."""
    n, dim_in = x.shape
    h1 = params["gw1"].shape[1]
    h2 = params["gw2"].shape[1]
    dim_out = params["bo"].shape[-1]

    din_p = _ru(dim_in, 128)
    h1_p = _ru(h1, 128)
    h2_p = _ru(h2, 128)
    dout_p = _ru(dim_out, 128)

    # Row tile: 256 feeds the 2x256 MXU (v6e/v7x) at full width when the graph
    # is big enough; otherwise 128 (v5e MXU width).  Always pad to >= 2 row
    # tiles so v7x's two TensorCores both get work on the "parallel" axis, and
    # every block stays lane-dense.
    tm = 256 if n >= 512 else 128
    n_p = max(_ru(n, tm), 2 * tm)
    nt = n_p // tm

    # Lane-pad + bf16-cast matmul operands (zero padding is exact; biases f32).
    x_p = _pad2(x, n_p, din_p).astype(BF16)
    a_p = _pad2(a_hat, n_p, n_p).astype(BF16)
    gw1 = _pad2(params["gw1"], din_p, h1_p).astype(BF16)
    lw1 = _pad2(params["lw1"], din_p, h1_p).astype(BF16)
    gb1 = _pad2(params["gb1"], 1, h1_p).astype(F32)
    lb1 = _pad2(params["lb1"], 1, h1_p).astype(F32)
    lw2 = _pad2(params["lw2"], h1_p, h2_p).astype(BF16)
    lb2 = _pad2(params["lb2"], 1, h2_p).astype(F32)
    gw2 = _pad2(params["gw2"], h1_p, h2_p).astype(BF16)
    gb2 = _pad2(params["gb2"], 1, h2_p).astype(F32)
    wo_lin = _pad2(params["wo_lin"], h2_p, dout_p).astype(BF16)
    wo_gcn = _pad2(params["wo_gcn"], h2_p, dout_p).astype(BF16)
    bo = _pad2(params["bo"], 1, dout_p).astype(F32)

    def const1(shape):   # constant-index operand, 1-D grid
        return pl.BlockSpec(shape, lambda i: (0, 0))

    def const2(shape):   # constant-index operand, 2-D grid
        return pl.BlockSpec(shape, lambda i, k: (0, 0))

    # ------------------------------ prologue --------------------------------
    flops0 = int(4 * n_p * din_p * h1_p + 2 * n_p * h1_p * h2_p)
    bytes0 = int(2 * (n_p * din_p + 2 * din_p * h1_p + h1_p * h2_p
                      + n_p * h1_p + n_p * h2_p) + 4 * (2 * h1_p + h2_p))

    prologue = pl.pallas_call(
        _prologue_kernel,
        out_shape=(jax.ShapeDtypeStruct((n_p, h1_p), BF16),    # XW1 = X @ gw1
                   jax.ShapeDtypeStruct((n_p, h2_p), BF16)),   # l2 (linear branch)
        grid_spec=pltpu.PrefetchScalarGridSpec(
            num_scalar_prefetch=0,
            grid=(nt,),
            in_specs=[
                pl.BlockSpec((tm, din_p), lambda i: (i, 0)),   # x row tile
                const1((din_p, h1_p)), const1((din_p, h1_p)),  # gw1, lw1
                const1((1, h1_p)),                             # lb1
                const1((h1_p, h2_p)), const1((1, h2_p)),       # lw2, lb2
            ],
            out_specs=(pl.BlockSpec((tm, h1_p), lambda i: (i, 0)),
                       pl.BlockSpec((tm, h2_p), lambda i: (i, 0)))),
        compiler_params=pltpu.CompilerParams(dimension_semantics=("parallel",)),
        cost_estimate=pl.CostEstimate(flops=flops0, transcendentals=0,
                                      bytes_accessed=bytes0),
    )
    xw1, l2 = prologue(x_p, gw1, lw1, lb1, lw2, lb2)

    grid = (nt, nt)
    dsem = ("parallel", "arbitrary")   # row tiles shard across TCs; K axis last

    # ------------------------------ stage 1 ---------------------------------
    flops1 = int(2 * n_p * n_p * h1_p + 2 * n_p * h1_p * h2_p)
    bytes1 = int(2 * (n_p * n_p + nt * n_p * h1_p + h1_p * h2_p + n_p * h2_p)
                 + 4 * h1_p)

    stage1 = pl.pallas_call(
        _stage1_kernel,
        out_shape=jax.ShapeDtypeStruct((n_p, h2_p), BF16),     # g1w2 = g1 @ gw2
        grid_spec=pltpu.PrefetchScalarGridSpec(
            num_scalar_prefetch=0,
            grid=grid,
            in_specs=[
                pl.BlockSpec((tm, tm), lambda i, k: (i, k)),     # A_hat tile
                pl.BlockSpec((tm, h1_p), lambda i, k: (k, 0)),   # XW1, K rows
                const2((1, h1_p)),                               # gb1
                const2((h1_p, h2_p)),                            # gw2
            ],
            out_specs=pl.BlockSpec((tm, h2_p), lambda i, k: (i, 0)),
            scratch_shapes=[pltpu.VMEM((tm, h1_p), F32)]),
        compiler_params=pltpu.CompilerParams(dimension_semantics=dsem),
        cost_estimate=pl.CostEstimate(flops=flops1, transcendentals=0,
                                      bytes_accessed=bytes1),
    )
    g1w2 = stage1(a_p, xw1, gb1, gw2)

    # ------------------------------ stage 2 ---------------------------------
    flops2 = int(2 * n_p * n_p * h2_p + 4 * n_p * h2_p * dout_p)
    bytes2 = int(2 * (n_p * n_p + nt * n_p * h2_p + n_p * h2_p
                      + 2 * h2_p * dout_p)
                 + 4 * (2 * n_p * dout_p + h2_p + dout_p))

    stage2 = pl.pallas_call(
        functools.partial(_stage2_kernel, dim_out=dim_out),
        out_shape=(jax.ShapeDtypeStruct((n_p, dout_p), F32),    # logits h
                   jax.ShapeDtypeStruct((n_p, dout_p), F32)),   # softmax(h)
        grid_spec=pltpu.PrefetchScalarGridSpec(
            num_scalar_prefetch=0,
            grid=grid,
            in_specs=[
                pl.BlockSpec((tm, tm), lambda i, k: (i, k)),     # A_hat tile
                pl.BlockSpec((tm, h2_p), lambda i, k: (k, 0)),   # g1w2, K rows
                pl.BlockSpec((tm, h2_p), lambda i, k: (i, 0)),   # l2, I rows
                const2((1, h2_p)),                               # gb2
                const2((h2_p, dout_p)), const2((h2_p, dout_p)),  # Wout split
                const2((1, dout_p)),                             # bo
            ],
            out_specs=(pl.BlockSpec((tm, dout_p), lambda i, k: (i, 0)),
                       pl.BlockSpec((tm, dout_p), lambda i, k: (i, 0))),
            scratch_shapes=[pltpu.VMEM((tm, h2_p), F32)]),
        compiler_params=pltpu.CompilerParams(dimension_semantics=dsem),
        cost_estimate=pl.CostEstimate(flops=flops2,
                                      transcendentals=int(n_p * dout_p),
                                      bytes_accessed=bytes2),
    )
    logits_p, soft_p = stage2(a_p, g1w2, l2, gb2, wo_lin, wo_gcn, bo)

    return logits_p[:n, :dim_out], soft_p[:n, :dim_out]


# ------------------------------ glue / reference ----------------------------
def build_normalized_adj(edge_index, num_nodes):
    """Dense A_hat = D^-1/2 (A + I) D^-1/2 (PyG GCNConv normalization)."""
    src, dst = edge_index
    a = jnp.zeros((num_nodes, num_nodes), jnp.float32)
    a = a.at[dst, src].add(1.0)
    a = a + jnp.eye(num_nodes, dtype=jnp.float32)
    deg = jnp.sum(a, axis=1)
    d_inv_sqrt = jnp.where(deg > 0, jax.lax.rsqrt(deg), 0.0)
    return d_inv_sqrt[:, None] * a * d_inv_sqrt[None, :]


def init_params(key, dim_in, h1, h2, dim_out):
    ks = jax.random.split(key, 12)

    def glorot(k, shape):
        lim = np.sqrt(6.0 / (shape[0] + shape[1]))
        return jax.random.uniform(k, shape, jnp.float32, -lim, lim)

    def bias(k, width):
        return 0.1 * jax.random.normal(k, (1, width), jnp.float32)

    wo = glorot(ks[6], (2 * h2, dim_out))
    return {
        "gw1": glorot(ks[0], (dim_in, h1)), "gb1": bias(ks[7], h1),
        "gw2": glorot(ks[1], (h1, h2)),     "gb2": bias(ks[8], h2),
        "lw1": glorot(ks[2], (dim_in, h1)), "lb1": bias(ks[9], h1),
        "lw2": glorot(ks[3], (h1, h2)),     "lb2": bias(ks[10], h2),
        "wo_lin": wo[:h2],                  # multiplies lin_h  (first half of cat)
        "wo_gcn": wo[h2:],                  # multiplies graph_h (second half)
        "bo": bias(ks[11], dim_out),
    }


def reference_forward(x, a_hat, p):
    relu = lambda v: jnp.maximum(v, 0.0)
    g = relu(a_hat @ (x @ p["gw1"]) + p["gb1"])
    g = relu(a_hat @ (g @ p["gw2"]) + p["gb2"])
    l = relu(x @ p["lw1"] + p["lb1"])
    l = relu(l @ p["lw2"] + p["lb2"])
    h = jnp.concatenate([l, g], axis=1)
    logits = h @ jnp.concatenate([p["wo_lin"], p["wo_gcn"]], axis=0) + p["bo"]
    return logits, jax.nn.softmax(logits, axis=1)


if __name__ == "__main__":
    key = jax.random.PRNGKey(0)
    k_x, k_p = jax.random.split(key)

    # small shapes: N=200 nodes (pads to 256 -> 2x2 grid), dim_in=16, h1=h2=32, dim_out=4
    N, DIM_IN, H1, H2, DIM_OUT = 200, 16, 32, 32, 4

    x = jax.random.normal(k_x, (N, DIM_IN), jnp.float32)
    # deterministic undirected ring graph
    src = np.arange(N)
    dst = (src + 1) % N
    edge_index = jnp.asarray(
        np.stack([np.concatenate([src, dst]), np.concatenate([dst, src])]),
        dtype=jnp.int32)

    a_hat = build_normalized_adj(edge_index, N)
    params = init_params(k_p, DIM_IN, H1, H2, DIM_OUT)

    logits, soft = gcnot_forward(x, a_hat, params)
    jax.block_until_ready((logits, soft))

    ref_logits, ref_soft = reference_forward(x, a_hat, params)
    # bf16 operands + approx reciprocal -> loosened tolerances (f32 accumulation).
    np.testing.assert_allclose(np.asarray(logits), np.asarray(ref_logits),
                               rtol=5e-2, atol=5e-2)
    np.testing.assert_allclose(np.asarray(soft), np.asarray(ref_soft),
                               rtol=5e-2, atol=5e-2)

    print("KERNEL_OK")
</pallas_src>

<mosaic_0001>
module attributes {stable_mosaic.version = 11 : i64} {
  func.func @_prologue_kernel(%arg0: i32, %arg1: memref<128x128xbf16, #tpu.memory_space<vmem>>, %arg2: memref<128x128xbf16, #tpu.memory_space<vmem>>, %arg3: memref<128x128xbf16, #tpu.memory_space<vmem>>, %arg4: memref<1x128xf32, #tpu.memory_space<vmem>>, %arg5: memref<128x128xbf16, #tpu.memory_space<vmem>>, %arg6: memref<1x128xf32, #tpu.memory_space<vmem>>, %arg7: memref<128x128xbf16, #tpu.memory_space<vmem>>, %arg8: memref<128x128xbf16, #tpu.memory_space<vmem>>) attributes {dimension_semantics = [#tpu.dimension_semantics<parallel>], iteration_bounds = array<i64: 2>, scalar_prefetch = 0 : i64, scratch_operands = 0 : i64, tpu.core_type = #tpu.core_type<tc>, window_params = [{transform_indices = @transform_0, window_bounds = array<i64: 128, 128>}, {pipeline_mode = #tpu.pipeline_mode<synchronous>, transform_indices = @transform_1, window_bounds = array<i64: 128, 128>}, {pipeline_mode = #tpu.pipeline_mode<synchronous>, transform_indices = @transform_2, window_bounds = array<i64: 128, 128>}, {pipeline_mode = #tpu.pipeline_mode<synchronous>, transform_indices = @transform_3, window_bounds = array<i64: 1, 128>}, {pipeline_mode = #tpu.pipeline_mode<synchronous>, transform_indices = @transform_4, window_bounds = array<i64: 128, 128>}, {pipeline_mode = #tpu.pipeline_mode<synchronous>, transform_indices = @transform_5, window_bounds = array<i64: 1, 128>}, {transform_indices = @transform_6, window_bounds = array<i64: 128, 128>}, {transform_indices = @transform_7, window_bounds = array<i64: 128, 128>}]} {
    %c0 = arith.constant 0 : index
    %c0_0 = arith.constant 0 : index
    %0 = vector.load %arg1[%c0, %c0_0] : memref<128x128xbf16, #tpu.memory_space<vmem>>, vector<128x128xbf16>
    %c0_1 = arith.constant 0 : index
    %c0_2 = arith.constant 0 : index
    %1 = vector.load %arg2[%c0_1, %c0_2] : memref<128x128xbf16, #tpu.memory_space<vmem>>, vector<128x128xbf16>
    %cst = arith.constant dense<0.000000e+00> : vector<128x128xf32>
    %2 = tpu.matmul %0, %1, %cst {dimension_numbers = #tpu.dot_dimension_numbers<[1], [0], [0], [1], [0, 0, 1, 1], [], []>} : vector<128x128xbf16>, vector<128x128xbf16>, vector<128x128xf32> -> vector<128x128xf32>
    %3 = arith.truncf %2 : vector<128x128xf32> to vector<128x128xbf16>
    %c0_3 = arith.constant 0 : index
    %c0_4 = arith.constant 0 : index
    %4 = vector.load %arg7[%c0_3, %c0_4] : memref<128x128xbf16, #tpu.memory_space<vmem>>, vector<128x128xbf16>
    tpu.vector_store %arg7[%c0_3, %c0_4], %3 {strides = array<i32>} : memref<128x128xbf16, #tpu.memory_space<vmem>>, vector<128x128xbf16>,
    %c0_5 = arith.constant 0 : index
    %c0_6 = arith.constant 0 : index
    %5 = vector.load %arg3[%c0_5, %c0_6] : memref<128x128xbf16, #tpu.memory_space<vmem>>, vector<128x128xbf16>
    %cst_7 = arith.constant dense<0.000000e+00> : vector<128x128xf32>
    %6 = tpu.matmul %0, %5, %cst_7 {dimension_numbers = #tpu.dot_dimension_numbers<[1], [0], [0], [1], [0, 0, 1, 1], [], []>} : vector<128x128xbf16>, vector<128x128xbf16>, vector<128x128xf32> -> vector<128x128xf32>
    %c0_8 = arith.constant 0 : index
    %c0_9 = arith.constant 0 : index
    %7 = vector.load %arg4[%c0_8, %c0_9] : memref<1x128xf32, #tpu.memory_space<vmem>>, vector<1x128xf32>
    %8 = vector.broadcast %7 : vector<1x128xf32> to vector<128x128xf32>
    %9 = arith.addf %6, %8 : vector<128x128xf32>
    %cst_10 = arith.constant 0.000000e+00 : f32
    %10 = vector.broadcast %cst_10 : f32 to vector<128x128xf32>
    %11 = arith.maximumf %9, %10 : vector<128x128xf32>
    %12 = arith.truncf %11 : vector<128x128xf32> to vector<128x128xbf16>
    %c0_11 = arith.constant 0 : index
    %c0_12 = arith.constant 0 : index
    %13 = vector.load %arg5[%c0_11, %c0_12] : memref<128x128xbf16, #tpu.memory_space<vmem>>, vector<128x128xbf16>
    %cst_13 = arith.constant dense<0.000000e+00> : vector<128x128xf32>
    %14 = tpu.matmul %12, %13, %cst_13 {dimension_numbers = #tpu.dot_dimension_numbers<[1], [0], [0], [1], [0, 0, 1, 1], [], []>} : vector<128x128xbf16>, vector<128x128xbf16>, vector<128x128xf32> -> vector<128x128xf32>
    %c0_14 = arith.constant 0 : index
    %c0_15 = arith.constant 0 : index
    %15 = vector.load %arg6[%c0_14, %c0_15] : memref<1x128xf32, #tpu.memory_space<vmem>>, vector<1x128xf32>
    %16 = vector.broadcast %15 : vector<1x128xf32> to vector<128x128xf32>
    %17 = arith.addf %14, %16 : vector<128x128xf32>
    %cst_16 = arith.constant 0.000000e+00 : f32
    %18 = vector.broadcast %cst_16 : f32 to vector<128x128xf32>
    %19 = arith.maximumf %17, %18 : vector<128x128xf32>
    %20 = arith.truncf %19 : vector<128x128xf32> to vector<128x128xbf16>
    %c0_17 = arith.constant 0 : index
    %c0_18 = arith.constant 0 : index
    %21 = vector.load %arg8[%c0_17, %c0_18] : memref<128x128xbf16, #tpu.memory_space<vmem>>, vector<128x128xbf16>
    tpu.vector_store %arg8[%c0_17, %c0_18], %20 {strides = array<i32>} : memref<128x128xbf16, #tpu.memory_space<vmem>>, vector<128x128xbf16>,
    return
  }
  func.func @transform_0(%arg0: i32) -> (i32, i32) {
    %c0_i32 = arith.constant 0 : i32
    %c0_i32_0 = arith.constant 0 : i32
    return %arg0, %c0_i32 : i32, i32
  }
  func.func @transform_1(%arg0: i32) -> (i32, i32) {
    %c0_i32 = arith.constant 0 : i32
    %c0_i32_0 = arith.constant 0 : i32
    %c0_i32_1 = arith.constant 0 : i32
    return %c0_i32, %c0_i32_0 : i32, i32
  }
  func.func @transform_2(%arg0: i32) -> (i32, i32) {
    %c0_i32 = arith.constant 0 : i32
    %c0_i32_0 = arith.constant 0 : i32
    %c0_i32_1 = arith.constant 0 : i32
    return %c0_i32, %c0_i32_0 : i32, i32
  }
  func.func @transform_3(%arg0: i32) -> (i32, i32) {
    %c0_i32 = arith.constant 0 : i32
    %c0_i32_0 = arith.constant 0 : i32
    %c0_i32_1 = arith.constant 0 : i32
    return %c0_i32, %c0_i32_0 : i32, i32
  }
  func.func @transform_4(%arg0: i32) -> (i32, i32) {
    %c0_i32 = arith.constant 0 : i32
    %c0_i32_0 = arith.constant 0 : i32
    %c0_i32_1 = arith.constant 0 : i32
    return %c0_i32, %c0_i32_0 : i32, i32
  }
  func.func @transform_5(%arg0: i32) -> (i32, i32) {
    %c0_i32 = arith.constant 0 : i32
    %c0_i32_0 = arith.constant 0 : i32
    %c0_i32_1 = arith.constant 0 : i32
    return %c0_i32, %c0_i32_0 : i32, i32
  }
  func.func @transform_6(%arg0: i32) -> (i32, i32) {
    %c0_i32 = arith.constant 0 : i32
    %c0_i32_0 = arith.constant 0 : i32
    return %arg0, %c0_i32 : i32, i32
  }
  func.func @transform_7(%arg0: i32) -> (i32, i32) {
    %c0_i32 = arith.constant 0 : i32
    %c0_i32_0 = arith.constant 0 : i32
    return %arg0, %c0_i32 : i32, i32
  }
}

</mosaic_0001>

<llo_original>
// kernel: tpu_custom_call.1
$region0: #{tpu_custom_call.1}
  #allocation0 [shape = 'u32[]', space=smem, size = 0x4, offset = 0x4, fixed_abs, tag = 'smem constant byte address 0x4 - core index']
  #allocation1 [shape = 'u32[72,128]{1,0:T(1,128)}', space=vmem, size = 0x9000, scoped, tag = 'internal scratch']
  %s0 = inlined_call_operand.hbm [shape: bf16[256,128], index: 0, kind: input, shape index: {}]
  %s1 = inlined_call_operand.hbm [shape: bf16[128,128], index: 1, kind: input, shape index: {}]
  %s2 = inlined_call_operand.hbm [shape: bf16[128,128], index: 2, kind: input, shape index: {}]
  %s3 = inlined_call_operand.vmem [shape: f32[1,128], index: 3, kind: input, shape index: {}]
  %s4 = inlined_call_operand.hbm [shape: bf16[128,128], index: 4, kind: input, shape index: {}]
  %s5 = inlined_call_operand.vmem [shape: f32[1,128], index: 5, kind: input, shape index: {}]
  %s6 = inlined_call_operand.hbm [shape: bf16[256,128], index: 6, kind: output, shape index: {0}]
  %s7 = inlined_call_operand.hbm [shape: bf16[256,128], index: 7, kind: output, shape index: {1}]
  %8 = xla_tuple %s6, %s7
  %s9 = sld [smem:[#allocation0]]
  $region81: #{tpu_custom_call.1} parent=0
    _
  %s11 = ssub.s32 1, %s9
  %s12 = scalar_select 0, %s11, %s9
  $region1: #{tpu_custom_call.1} parent=0
    #allocation2 [shape = 'u8[65536]{0}', space=vmem, size = 0x10000, scoped, tag = 'input window, operand 0']
    #allocation3 [shape = 's32[2]{0}', space=sflag, size = 0x8, scoped, tag = 'scoped memory for tpu_custom_call.1']
    #allocation4 [shape = 's32[2]{0}', space=sflag, size = 0x8, scoped, tag = 'scoped memory for tpu_custom_call.1']
    #allocation5 [shape = 'u8[32768]{0}', space=vmem, size = 0x8000, scoped, tag = 'input window, operand 1, single buffered']
    #allocation6 [shape = 's32[1]{0}', space=sflag, size = 0x4, scoped, tag = 'scoped memory for tpu_custom_call.1']
    #allocation7 [shape = 'u8[32768]{0}', space=vmem, size = 0x8000, scoped, tag = 'input window, operand 2, single buffered']
    #allocation8 [shape = 'u8[32768]{0}', space=vmem, size = 0x8000, scoped, tag = 'input window, operand 4, single buffered']
    #allocation9 [shape = 's32[1]{0}', space=sflag, size = 0x4, scoped, tag = 'scoped memory for tpu_custom_call.1']
    #allocation10 [shape = 'u8[65536]{0}', space=vmem, size = 0x10000, scoped, tag = 'output window, operand 0']
    #allocation11 [shape = 'u8[65536]{0}', space=vmem, size = 0x10000, scoped, tag = 'output window, operand 1']
    #allocation12 [shape = 's32[2]{0}', space=sflag, size = 0x8, scoped, tag = 'scoped memory for tpu_custom_call.1']
    %13 = vsyncpa [#allocation3], 0
    %s14 = scalar_lea.sflag [#allocation3], 1
    %15 = vsyncpa %s14, 0
    %16 = vsyncpa [#allocation6], 0
    %17 = vsyncpa [#allocation9], 0
    %18 = vsyncpa [#allocation4], 0
    %s19 = scalar_lea.sflag [#allocation4], 1
    %20 = vsyncpa %s19, 0
    %21 = vsyncpa [#allocation12], 0
    %s22 = scalar_lea.sflag [#allocation12], 1
    %23 = vsyncpa %s22, 0
    loop: start=0, step=1, limit=4
    $region2: #{tpu_custom_call.1} parent=1 // loop_pre_header
      _
    $region3: #{tpu_custom_call.1} parent=1 // loop_header
      %s25 = sphi 0, %s29
      %p26 = scmp.ge.s32.totalorder %s25, 4
      %s35 = sphi 0, %s37
      %s38 = sphi 0, %s35
      %s39 = sphi 0, %s38
      %s55 = sphi 0, %s39
      %s59 = sphi 0, %s59
      %s61 = sphi 0, %s59
      %s62 = sphi 0, %s61
      %s76 = sphi 0, %s62
      %s80 = sphi 0, %s80
      %s82 = sphi 0, %s80
      %s83 = sphi 0, %s82
      %s97 = sphi 0, %s83
      %s101 = sphi 0, %s101
      %s103 = sphi 0, %s101
      %s104 = sphi 0, %s103
      %s118 = sphi 0, %s104
      %s122 = sphi 0, %s122
      %s124 = sphi 0, %s122
      %s125 = sphi 0, %s124
      %s139 = sphi 0, %s125
      %s143 = sphi 0, %s143
      %s145 = sphi 0, %s143
      %s146 = sphi 0, %s145
      %s160 = sphi 0, %s146
      %s166 = sphi 0, %s168
      %s169 = sphi 0, %s166
      %s170 = sphi 0, %s169
      %s186 = sphi 0, %s170
      %s192 = sphi 0, %s194
      %s195 = sphi 0, %s192
      %s196 = sphi 0, %s195
      %s212 = sphi 0, %s196
    $region4: #{tpu_custom_call.1} parent=1 // loop_header_branch
      %28 = sbr.rel (%p26) target = $region8
    $region5: #{tpu_custom_call.1} parent=1 // loop_body
      %s30 = ssub.s32 %s25, 1
      %s31 = ssub.s32 %s25, 2
      %s32 = sadd.s32 %s25, 1
      %s33 = ssub.s32 %s25, %s32
      %p34 = scmp.eq.s32.totalorder %s33, 0
      %s36 = sadd.s32 %s35, 1
      %s37 = scalar_select %p34, %s35, %s36
      %p40 = pneg %p34
      %p41 = scmp.eq.s32.totalorder %s25, 1
      %p42 = por %p40, %p41
      %p43 = scmp.ne.s32.totalorder %s35, %s38
      %p44 = scmp.eq.s32.totalorder %s25, 0
      %p45 = por %p43, %p44
      %p46 = scmp.ne.s32.totalorder %s35, %s38
      %p47 = scmp.eq.s32.totalorder %s30, 1
      %p48 = por %p46, %p47
      %p49 = scmp.ne.s32.totalorder %s38, %s39
      %p50 = scmp.eq.s32.totalorder %s30, 0
      %p51 = por %p49, %p50
      %p52 = scmp.ne.s32.totalorder %s38, %s39
      %p53 = scmp.eq.s32.totalorder %s31, 1
      %p54 = por %p52, %p53
      %p56 = scmp.ne.s32.totalorder %s39, %s55
      %p57 = scmp.eq.s32.totalorder %s31, 0
      %p58 = por %p56, %p57
      %s60 = sadd.s32 %s59, 1
      %p63 = scmp.eq.s32.totalorder %s25, 1
      %p64 = scmp.ne.s32.totalorder %s59, %s61
      %p65 = scmp.eq.s32.totalorder %s25, 0
      %p66 = por %p64, %p65
      %p67 = scmp.ne.s32.totalorder %s59, %s61
      %p68 = scmp.eq.s32.totalorder %s30, 1
      %p69 = por %p67, %p68
      %p70 = scmp.ne.s32.totalorder %s61, %s62
      %p71 = scmp.eq.s32.totalorder %s30, 0
      %p72 = por %p70, %p71
      %p73 = scmp.ne.s32.totalorder %s61, %s62
      %p74 = scmp.eq.s32.totalorder %s31, 1
      %p75 = por %p73, %p74
      %p77 = scmp.ne.s32.totalorder %s62, %s76
      %p78 = scmp.eq.s32.totalorder %s31, 0
      %p79 = por %p77, %p78
      %s81 = sadd.s32 %s80, 1
      %p84 = scmp.eq.s32.totalorder %s25, 1
      %p85 = scmp.ne.s32.totalorder %s80, %s82
      %p86 = scmp.eq.s32.totalorder %s25, 0
      %p87 = por %p85, %p86
      %p88 = scmp.ne.s32.totalorder %s80, %s82
      %p89 = scmp.eq.s32.totalorder %s30, 1
      %p90 = por %p88, %p89
      %p91 = scmp.ne.s32.totalorder %s82, %s83
      %p92 = scmp.eq.s32.totalorder %s30, 0
      %p93 = por %p91, %p92
      %p94 = scmp.ne.s32.totalorder %s82, %s83
      %p95 = scmp.eq.s32.totalorder %s31, 1
      %p96 = por %p94, %p95
      %p98 = scmp.ne.s32.totalorder %s83, %s97
      %p99 = scmp.eq.s32.totalorder %s31, 0
      %p100 = por %p98, %p99
      %s102 = sadd.s32 %s101, 1
      %p105 = scmp.eq.s32.totalorder %s25, 1
      %p106 = scmp.ne.s32.totalorder %s101, %s103
      %p107 = scmp.eq.s32.totalorder %s25, 0
      %p108 = por %p106, %p107
      %p109 = scmp.ne.s32.totalorder %s101, %s103
      %p110 = scmp.eq.s32.totalorder %s30, 1
      %p111 = por %p109, %p110
      %p112 = scmp.ne.s32.totalorder %s103, %s104
      %p113 = scmp.eq.s32.totalorder %s30, 0
      %p114 = por %p112, %p113
      %p115 = scmp.ne.s32.totalorder %s103, %s104
      %p116 = scmp.eq.s32.totalorder %s31, 1
      %p117 = por %p115, %p116
      %p119 = scmp.ne.s32.totalorder %s104, %s118
      %p120 = scmp.eq.s32.totalorder %s31, 0
      %p121 = por %p119, %p120
      %s123 = sadd.s32 %s122, 1
      %p126 = scmp.eq.s32.totalorder %s25, 1
      %p127 = scmp.ne.s32.totalorder %s122, %s124
      %p128 = scmp.eq.s32.totalorder %s25, 0
      %p129 = por %p127, %p128
      %p130 = scmp.ne.s32.totalorder %s122, %s124
      %p131 = scmp.eq.s32.totalorder %s30, 1
      %p132 = por %p130, %p131
      %p133 = scmp.ne.s32.totalorder %s124, %s125
      %p134 = scmp.eq.s32.totalorder %s30, 0
      %p135 = por %p133, %p134
      %p136 = scmp.ne.s32.totalorder %s124, %s125
      %p137 = scmp.eq.s32.totalorder %s31, 1
      %p138 = por %p136, %p137
      %p140 = scmp.ne.s32.totalorder %s125, %s139
      %p141 = scmp.eq.s32.totalorder %s31, 0
      %p142 = por %p140, %p141
      %s144 = sadd.s32 %s143, 1
      %p147 = scmp.eq.s32.totalorder %s25, 1
      %p148 = scmp.ne.s32.totalorder %s143, %s145
      %p149 = scmp.eq.s32.totalorder %s25, 0
      %p150 = por %p148, %p149
      %p151 = scmp.ne.s32.totalorder %s143, %s145
      %p152 = scmp.eq.s32.totalorder %s30, 1
      %p153 = por %p151, %p152
      %p154 = scmp.ne.s32.totalorder %s145, %s146
      %p155 = scmp.eq.s32.totalorder %s30, 0
      %p156 = por %p154, %p155
      %p157 = scmp.ne.s32.totalorder %s145, %s146
      %p158 = scmp.eq.s32.totalorder %s31, 1
      %p159 = por %p157, %p158
      %p161 = scmp.ne.s32.totalorder %s146, %s160
      %p162 = scmp.eq.s32.totalorder %s31, 0
      %p163 = por %p161, %p162
      %s164 = ssub.s32 %s25, %s32
      %p165 = scmp.eq.s32.totalorder %s164, 0
      %s167 = sadd.s32 %s166, 1
      %s168 = scalar_select %p165, %s166, %s167
      %p171 = pneg %p165
      %p172 = scmp.eq.s32.totalorder %s25, 1
      %p173 = por %p171, %p172
      %p174 = scmp.ne.s32.totalorder %s166, %s169
      %p175 = scmp.eq.s32.totalorder %s25, 0
      %p176 = por %p174, %p175
      %p177 = scmp.ne.s32.totalorder %s166, %s169
      %p178 = scmp.eq.s32.totalorder %s30, 1
      %p179 = por %p177, %p178
      %p180 = scmp.ne.s32.totalorder %s169, %s170
      %p181 = scmp.eq.s32.totalorder %s30, 0
      %p182 = por %p180, %p181
      %p183 = scmp.ne.s32.totalorder %s169, %s170
      %p184 = scmp.eq.s32.totalorder %s31, 1
      %p185 = por %p183, %p184
      %p187 = scmp.ne.s32.totalorder %s170, %s186
      %p188 = scmp.eq.s32.totalorder %s31, 0
      %p189 = por %p187, %p188
      %s190 = ssub.s32 %s25, %s32
      %p191 = scmp.eq.s32.totalorder %s190, 0
      %s193 = sadd.s32 %s192, 1
      %s194 = scalar_select %p191, %s192, %s193
      %p197 = pneg %p191
      %p198 = scmp.eq.s32.totalorder %s25, 1
      %p199 = por %p197, %p198
      %p200 = scmp.ne.s32.totalorder %s192, %s195
      %p201 = scmp.eq.s32.totalorder %s25, 0
      %p202 = por %p200, %p201
      %p203 = scmp.ne.s32.totalorder %s192, %s195
      %p204 = scmp.eq.s32.totalorder %s30, 1
      %p205 = por %p203, %p204
      %p206 = scmp.ne.s32.totalorder %s195, %s196
      %p207 = scmp.eq.s32.totalorder %s30, 0
      %p208 = por %p206, %p207
      %p209 = scmp.ne.s32.totalorder %s195, %s196
      %p210 = scmp.eq.s32.totalorder %s31, 1
      %p211 = por %p209, %p210
      %p213 = scmp.ne.s32.totalorder %s196, %s212
      %p214 = scmp.eq.s32.totalorder %s31, 0
      %p215 = por %p213, %p214
      %p216 = scmp.le.s32.totalorder 1, %s25
      %p217 = scmp.lt.s32.totalorder %s25, 3
      %p218 = pnand %p216, %p217
      %p219 = pneg %p218
      // Predicated region
      $region9: #{tpu_custom_call.1} parent=5 // pred_check
        _
      $region10: #{tpu_custom_call.1} parent=5 // pred_check_branch
        %221 = sbr.rel (%p218) target = $region12
      $region11: #{tpu_custom_call.1} parent=5 // pred_region
        %s222 = ssub.s32 %s25, 1
        // Predicated region
        $region13: #{tpu_custom_call.1} parent=11 // pred_check
          %p223 = pneg %p72
        $region14: #{tpu_custom_call.1} parent=11 // pred_check_branch
          %225 = sbr.rel (%p223) target = $region16
        $region15: #{tpu_custom_call.1} parent=11 // pred_region
          %227 = vsyncadd [#allocation6], 0
          %s228 = sshll.u32 %s1, 4
          %s229 = int_to_ptr.hbm [resolvable:$true] %s228
          %s230 = sshll.u32 [#allocation5], 4
          %s231 = int_to_ptr.vmem [resolvable:$true] %s230
          %236 = dma.hbm_to_vmem [thread:$0]  %s229, 1024, %s231, [#allocation6], 64, 64, 4
        $region16: #{tpu_custom_call.1} parent=11 // pred_fallthru
          _
        // Predicated region
        $region17: #{tpu_custom_call.1} parent=11 // pred_check
          %p237 = pneg %p93
        $region18: #{tpu_custom_call.1} parent=11 // pred_check_branch
          %239 = sbr.rel (%p237) target = $region20
        $region19: #{tpu_custom_call.1} parent=11 // pred_region
          %241 = vsyncadd [#allocation6], 0
          %s242 = sshll.u32 %s2, 4
          %s243 = int_to_ptr.hbm [resolvable:$true] %s242
          %s244 = sshll.u32 [#allocation7], 4
          %s245 = int_to_ptr.vmem [resolvable:$true] %s244
          %250 = dma.hbm_to_vmem [thread:$0]  %s243, 1024, %s245, [#allocation6], 64, 64, 4
        $region20: #{tpu_custom_call.1} parent=11 // pred_fallthru
          _
        // Predicated region
        $region21: #{tpu_custom_call.1} parent=11 // pred_check
          %p251 = pneg %p114
        $region22: #{tpu_custom_call.1} parent=11 // pred_check_branch
          %253 = sbr.rel (%p251) target = $region24
        $region23: #{tpu_custom_call.1} parent=11 // pred_region
          _
        $region24: #{tpu_custom_call.1} parent=11 // pred_fallthru
          _
        // Predicated region
        $region25: #{tpu_custom_call.1} parent=11 // pred_check
          %p254 = pneg %p135
        $region26: #{tpu_custom_call.1} parent=11 // pred_check_branch
          %256 = sbr.rel (%p254) target = $region28
        $region27: #{tpu_custom_call.1} parent=11 // pred_region
          %258 = vsyncadd [#allocation9], 0
          %s259 = sshll.u32 %s4, 4
          %s260 = int_to_ptr.hbm [resolvable:$true] %s259
          %s261 = sshll.u32 [#allocation8], 4
          %s262 = int_to_ptr.vmem [resolvable:$true] %s261
          %267 = dma.hbm_to_vmem [thread:$0]  %s260, 1024, %s262, [#allocation9], 64, 64, 4
        $region28: #{tpu_custom_call.1} parent=11 // pred_fallthru
          _
        // Predicated region
        $region29: #{tpu_custom_call.1} parent=11 // pred_check
          %p268 = pneg %p156
        $region30: #{tpu_custom_call.1} parent=11 // pred_check_branch
          %270 = sbr.rel (%p268) target = $region32
        $region31: #{tpu_custom_call.1} parent=11 // pred_region
          _
        $region32: #{tpu_custom_call.1} parent=11 // pred_fallthru
          _
      $region12: #{tpu_custom_call.1} parent=5 // pred_fallthru
        _
      %p271 = scmp.lt.s32.totalorder %s25, 2
      // Predicated region
      $region33: #{tpu_custom_call.1} parent=5 // pred_check
        %p272 = pneg %p271
      $region34: #{tpu_custom_call.1} parent=5 // pred_check_branch
        %274 = sbr.rel (%p272) target = $region36
      $region35: #{tpu_custom_call.1} parent=5 // pred_region
        // Predicated region
        $region37: #{tpu_custom_call.1} parent=35 // pred_check
          %p275 = pneg %p45
        $region38: #{tpu_custom_call.1} parent=35 // pred_check_branch
          %277 = sbr.rel (%p275) target = $region40
        $region39: #{tpu_custom_call.1} parent=35 // pred_region
          %s278 = sand.u32 %s35, 1
          %s279 = scalar_lea.sflag [#allocation3], %s278
          %s280 = sand.u32 %s35, 1
          %s281 = smul.addr %s280, 64
          %s282 = scalar_lea.vmem [#allocation2], %s281
          %s283 = smul.u32 16, %s25
          %285 = vsyncadd %s279, 0
          %s286 = smul.addr %s283, 4
          %s287 = scalar_lea.hbm %s0, %s286
          %s288 = sshll.u32 %s287, 4
          %s289 = int_to_ptr.hbm [resolvable:$true] %s288
          %s290 = sshll.u32 %s282, 4
          %s291 = int_to_ptr.vmem [resolvable:$true] %s290
          %296 = dma.hbm_to_vmem [thread:$0]  %s289, 1024, %s291, %s279, 64, 64, 4
        $region40: #{tpu_custom_call.1} parent=35 // pred_fallthru
          _
      $region36: #{tpu_custom_call.1} parent=5 // pred_fallthru
        _
      %p297 = scmp.le.s32.totalorder 1, %s25
      %p298 = scmp.lt.s32.totalorder %s25, 3
      %p299 = pnand %p297, %p298
      %p300 = pneg %p299
      // Predicated region
      $region41: #{tpu_custom_call.1} parent=5 // pred_check
        _
      $region42: #{tpu_custom_call.1} parent=5 // pred_check_branch
        %302 = sbr.rel (%p299) target = $region44
      $region43: #{tpu_custom_call.1} parent=5 // pred_region
        %s303 = ssub.s32 %s25, 1
        %s304 = sand.u32 %s38, 1
        %s305 = scalar_lea.sflag [#allocation3], %s304
        %s306 = sand.u32 %s38, 1
        %s307 = smul.addr %s306, 64
        %s308 = scalar_lea.vmem [#allocation2], %s307
        // Predicated region
        $region45: #{tpu_custom_call.1} parent=43 // pred_check
          %p309 = pneg %p51
        $region46: #{tpu_custom_call.1} parent=43 // pred_check_branch
          %311 = sbr.rel (%p309) target = $region48
        $region47: #{tpu_custom_call.1} parent=43 // pred_region
          %313 = dma.done %s305, 1024
        $region48: #{tpu_custom_call.1} parent=43 // pred_fallthru
          _
        // Predicated region
        $region49: #{tpu_custom_call.1} parent=43 // pred_check
          %p314 = pneg %p72
        $region50: #{tpu_custom_call.1} parent=43 // pred_check_branch
          %316 = sbr.rel (%p314) target = $region52
        $region51: #{tpu_custom_call.1} parent=43 // pred_region
          %318 = dma.done [#allocation6], 1024
        $region52: #{tpu_custom_call.1} parent=43 // pred_fallthru
          _
        // Predicated region
        $region53: #{tpu_custom_call.1} parent=43 // pred_check
          %p319 = pneg %p93
        $region54: #{tpu_custom_call.1} parent=43 // pred_check_branch
          %321 = sbr.rel (%p319) target = $region56
        $region55: #{tpu_custom_call.1} parent=43 // pred_region
          %323 = dma.done [#allocation6], 1024
        $region56: #{tpu_custom_call.1} parent=43 // pred_fallthru
          _
        // Predicated region
        $region57: #{tpu_custom_call.1} parent=43 // pred_check
          %p324 = pneg %p135
        $region58: #{tpu_custom_call.1} parent=43 // pred_check_branch
          %326 = sbr.rel (%p324) target = $region60
        $region59: #{tpu_custom_call.1} parent=43 // pred_region
          %328 = dma.done [#allocation9], 1024
        $region60: #{tpu_custom_call.1} parent=43 // pred_fallthru
          _
        %s329 = sand.u32 %s38, 1
        %s330 = scalar_lea.sflag [#allocation3], %s329
        %s331 = sand.u32 %s38, 1
        %s332 = smul.addr %s331, 64
        %s333 = scalar_lea.vmem [#allocation2], %s332
        %p334 = pneg %p51
        %p335 = pneg %p48
        %p336 = pneg %p72
        %p337 = pneg %p69
        %p338 = pneg %p93
        %p339 = pneg %p90
        %p340 = pneg %p114
        %p341 = pneg %p111
        %p342 = pneg %p135
        %p343 = pneg %p132
        %p344 = pneg %p156
        %p345 = pneg %p153
        %p346 = pneg %p182
        %p347 = pneg %p179
        %s348 = sand.u32 %s169, 1
        %s349 = scalar_lea.sflag [#allocation4], %s348
        %s350 = sand.u32 %s169, 1
        %s351 = smul.addr %s350, 64
        %s352 = scalar_lea.vmem [#allocation10], %s351
        %p353 = pneg %p208
        %p354 = pneg %p205
        %s355 = sand.u32 %s195, 1
        %s356 = scalar_lea.sflag [#allocation12], %s355
        %s357 = sand.u32 %s195, 1
        %s358 = smul.addr %s357, 64
        %s359 = scalar_lea.vmem [#allocation11], %s358
        %s360 = smul.u32 16, %s30
        %s361 = smul.u32 16, %s30
        %s362 = smul.u32 16, %s30
        %v363 = vld [vmem:[%s308] sm:$0xf]
        %v364 = vld [vmem:[%s308 + $0x4] sm:$0xf]
        %v365 = vld [vmem:[%s308 + $0x8] sm:$0xf]
        %v366 = vld [vmem:[%s308 + $0xc] sm:$0xf]
        %v367 = vld [vmem:[%s308 + $0x10] sm:$0xf]
        %v368 = vld [vmem:[%s308 + $0x14] sm:$0xf]
        %v369 = vld [vmem:[%s308 + $0x18] sm:$0xf]
        %v370 = vld [vmem:[%s308 + $0x1c] sm:$0xf]
        %v371 = vld [vmem:[%s308 + $0x20] sm:$0xf]
        %v372 = vld [vmem:[%s308 + $0x24] sm:$0xf]
        %v373 = vld [vmem:[%s308 + $0x28] sm:$0xf]
        %v374 = vld [vmem:[%s308 + $0x2c] sm:$0xf]
        %v375 = vld [vmem:[%s308 + $0x30] sm:$0xf]
        %v376 = vld [vmem:[%s308 + $0x34] sm:$0xf]
        %v377 = vld [vmem:[%s308 + $0x38] sm:$0xf]
        %v378 = vld [vmem:[%s308 + $0x3c] sm:$0xf]
        %v379 = vld [vmem:[#allocation5] sm:$0xf]
        %v380 = vld [vmem:[#allocation5 + $0x4] sm:$0xf]
        %v381 = vld [vmem:[#allocation5 + $0x8] sm:$0xf]
        %v382 = vld [vmem:[#allocation5 + $0xc] sm:$0xf]
        %v383 = vld [vmem:[#allocation5 + $0x10] sm:$0xf]
        %v384 = vld [vmem:[#allocation5 + $0x14] sm:$0xf]
        %v385 = vld [vmem:[#allocation5 + $0x18] sm:$0xf]
        %v386 = vld [vmem:[#allocation5 + $0x1c] sm:$0xf]
        %v387 = vld [vmem:[#allocation5 + $0x20] sm:$0xf]
        %v388 = vld [vmem:[#allocation5 + $0x24] sm:$0xf]
        %v389 = vld [vmem:[#allocation5 + $0x28] sm:$0xf]
        %v390 = vld [vmem:[#allocation5 + $0x2c] sm:$0xf]
        %v391 = vld [vmem:[#allocation5 + $0x30] sm:$0xf]
        %v392 = vld [vmem:[#allocation5 + $0x34] sm:$0xf]
        %v393 = vld [vmem:[#allocation5 + $0x38] sm:$0xf]
        %v394 = vld [vmem:[#allocation5 + $0x3c] sm:$0xf]
        %v411 = vunpack.c.l.b16 %v363
        %v412 = vunpack.c.l.b16 %v364
        %v413 = vunpack.c.l.b16 %v365
        %v414 = vunpack.c.l.b16 %v366
        %v415 = vunpack.c.l.b16 %v367
        %v416 = vunpack.c.l.b16 %v368
        %v417 = vunpack.c.l.b16 %v369
        %v418 = vunpack.c.l.b16 %v370
        %v419 = vunpack.c.l.b16 %v371
        %v420 = vunpack.c.l.b16 %v372
        %v421 = vunpack.c.l.b16 %v373
        %v422 = vunpack.c.l.b16 %v374
        %v423 = vunpack.c.l.b16 %v375
        %v424 = vunpack.c.l.b16 %v376
        %v425 = vunpack.c.l.b16 %v377
        %v426 = vunpack.c.l.b16 %v378
        %v427 = vpack.c.b16 %v412, %v411
        %v428 = vpack.c.b16 %v414, %v413
        %v429 = vpack.c.b16 %v416, %v415
        %v430 = vpack.c.b16 %v418, %v417
        %v431 = vpack.c.b16 %v420, %v419
        %v432 = vpack.c.b16 %v422, %v421
        %v433 = vpack.c.b16 %v424, %v423
        %v434 = vpack.c.b16 %v426, %v425
        %v459 = vunpack.c.l.b16 %v379
        %v460 = vunpack.c.l.b16 %v380
        %v461 = vunpack.c.l.b16 %v381
        %v462 = vunpack.c.l.b16 %v382
        %v463 = vunpack.c.l.b16 %v383
        %v464 = vunpack.c.l.b16 %v384
        %v465 = vunpack.c.l.b16 %v385
        %v466 = vunpack.c.l.b16 %v386
        %v467 = vunpack.c.l.b16 %v387
        %v468 = vunpack.c.l.b16 %v388
        %v469 = vunpack.c.l.b16 %v389
        %v470 = vunpack.c.l.b16 %v390
        %v471 = vunpack.c.l.b16 %v391
        %v472 = vunpack.c.l.b16 %v392
        %v473 = vunpack.c.l.b16 %v393
        %v474 = vunpack.c.l.b16 %v394
        %v475 = vpack.c.b16 %v460, %v459
        %v476 = vpack.c.b16 %v462, %v461
        %v477 = vpack.c.b16 %v464, %v463
        %v478 = vpack.c.b16 %v466, %v465
        %v479 = vpack.c.b16 %v468, %v467
        %v480 = vpack.c.b16 %v470, %v469
        %v481 = vpack.c.b16 %v472, %v471
        %v482 = vpack.c.b16 %v474, %v473
        %491 = vmatpush.bf16.msra.mxu0 %v482
        %492 = vmatpush.bf16.msra.mxu0 %v481
        %493 = vmatpush.bf16.msra.mxu0 %v480
        %494 = vmatpush.bf16.msra.mxu0 %v479
        %495 = vmatpush.bf16.msra.mxu0 %v478
        %496 = vmatpush.bf16.msra.mxu0 %v477
        %497 = vmatpush.bf16.msra.mxu0 %v476
        %498 = vmatpush.bf16.msra.mxu0 %v475
        %499 = vmatmul.bf16.gmra.mxu0 %v427
        %v500 = vpop.f32.mrf.mxu0
        %v501 = vadd.f32 0.0, %v500
        %v502 = vpop.f32.mrf.mxu0
        %v503 = vadd.f32 0.0, %v502
        %504 = vmatmul.bf16.gmra.mxu0 %v428
        %v505 = vpop.f32.mrf.mxu0
        %v506 = vadd.f32 0.0, %v505
        %v507 = vpop.f32.mrf.mxu0
        %v508 = vadd.f32 0.0, %v507
        %509 = vmatmul.bf16.gmra.mxu0 %v429
        %v510 = vpop.f32.mrf.mxu0
        %v511 = vadd.f32 0.0, %v510
        %v512 = vpop.f32.mrf.mxu0
        %v513 = vadd.f32 0.0, %v512
        %514 = vmatmul.bf16.gmra.mxu0 %v430
        %v515 = vpop.f32.mrf.mxu0
        %v516 = vadd.f32 0.0, %v515
        %v517 = vpop.f32.mrf.mxu0
        %v518 = vadd.f32 0.0, %v517
        %519 = vmatmul.bf16.gmra.mxu0 %v431
        %v520 = vpop.f32.mrf.mxu0
        %v521 = vadd.f32 0.0, %v520
        %v522 = vpop.f32.mrf.mxu0
        %v523 = vadd.f32 0.0, %v522
        %524 = vmatmul.bf16.gmra.mxu0 %v432
        %v525 = vpop.f32.mrf.mxu0
        %v526 = vadd.f32 0.0, %v525
        %v527 = vpop.f32.mrf.mxu0
        %v528 = vadd.f32 0.0, %v527
        %529 = vmatmul.bf16.gmra.mxu0 %v433
        %v530 = vpop.f32.mrf.mxu0
        %v531 = vadd.f32 0.0, %v530
        %v532 = vpop.f32.mrf.mxu0
        %v533 = vadd.f32 0.0, %v532
        %534 = vmatmul.bf16.gmra.mxu0 %v434
        %v535 = vpop.f32.mrf.mxu0
        %v536 = vadd.f32 0.0, %v535
        %v537 = vpop.f32.mrf.mxu0
        %v538 = vadd.f32 0.0, %v537
        %539 = vdwg.mxu0
        %v540 = vpack.c.bf16 %v501, %v501
        %v541 = vpack.c.bf16 %v503, %v503
        %v542 = vpack.c.bf16 %v506, %v506
        %v543 = vpack.c.bf16 %v508, %v508
        %v544 = vpack.c.bf16 %v511, %v511
        %v545 = vpack.c.bf16 %v513, %v513
        %v546 = vpack.c.bf16 %v516, %v516
        %v547 = vpack.c.bf16 %v518, %v518
        %v548 = vpack.c.bf16 %v521, %v521
        %v549 = vpack.c.bf16 %v523, %v523
        %v550 = vpack.c.bf16 %v526, %v526
        %v551 = vpack.c.bf16 %v528, %v528
        %v552 = vpack.c.bf16 %v531, %v531
        %v553 = vpack.c.bf16 %v533, %v533
        %v554 = vpack.c.bf16 %v536, %v536
        %v555 = vpack.c.bf16 %v538, %v538
        %556 = vst [vmem:[%s352] sm:$0xf] %v540
        %557 = vst [vmem:[%s352 + $0x4] sm:$0xf] %v541
        %558 = vst [vmem:[%s352 + $0x8] sm:$0xf] %v542
        %559 = vst [vmem:[%s352 + $0xc] sm:$0xf] %v543
        %560 = vst [vmem:[%s352 + $0x10] sm:$0xf] %v544
        %561 = vst [vmem:[%s352 + $0x14] sm:$0xf] %v545
        %562 = vst [vmem:[%s352 + $0x18] sm:$0xf] %v546
        %563 = vst [vmem:[%s352 + $0x1c] sm:$0xf] %v547
        %564 = vst [vmem:[%s352 + $0x20] sm:$0xf] %v548
        %565 = vst [vmem:[%s352 + $0x24] sm:$0xf] %v549
        %566 = vst [vmem:[%s352 + $0x28] sm:$0xf] %v550
        %567 = vst [vmem:[%s352 + $0x2c] sm:$0xf] %v551
        %568 = vst [vmem:[%s352 + $0x30] sm:$0xf] %v552
        %569 = vst [vmem:[%s352 + $0x34] sm:$0xf] %v553
        %570 = vst [vmem:[%s352 + $0x38] sm:$0xf] %v554
        %571 = vst [vmem:[%s352 + $0x3c] sm:$0xf] %v555
        %v572 = vld [vmem:[#allocation7] sm:$0xf]
        %v573 = vld [vmem:[#allocation7 + $0x4] sm:$0xf]
        %v574 = vld [vmem:[#allocation7 + $0x8] sm:$0xf]
        %v575 = vld [vmem:[#allocation7 + $0xc] sm:$0xf]
        %v576 = vld [vmem:[#allocation7 + $0x10] sm:$0xf]
        %v577 = vld [vmem:[#allocation7 + $0x14] sm:$0xf]
        %v578 = vld [vmem:[#allocation7 + $0x18] sm:$0xf]
        %v579 = vld [vmem:[#allocation7 + $0x1c] sm:$0xf]
        %v580 = vld [vmem:[#allocation7 + $0x20] sm:$0xf]
        %v581 = vld [vmem:[#allocation7 + $0x24] sm:$0xf]
        %v582 = vld [vmem:[#allocation7 + $0x28] sm:$0xf]
        %v583 = vld [vmem:[#allocation7 + $0x2c] sm:$0xf]
        %v584 = vld [vmem:[#allocation7 + $0x30] sm:$0xf]
        %v585 = vld [vmem:[#allocation7 + $0x34] sm:$0xf]
        %v586 = vld [vmem:[#allocation7 + $0x38] sm:$0xf]
        %v587 = vld [vmem:[#allocation7 + $0x3c] sm:$0xf]
        %v588 = vld [vmem:[%s3] sm:$0x1]
        %v590 = vperm.slane %v588, 0
        %v608 = vunpack.c.l.b16 %v572
        %v609 = vunpack.c.l.b16 %v573
        %v610 = vunpack.c.l.b16 %v574
        %v611 = vunpack.c.l.b16 %v575
        %v612 = vunpack.c.l.b16 %v576
        %v613 = vunpack.c.l.b16 %v577
        %v614 = vunpack.c.l.b16 %v578
        %v615 = vunpack.c.l.b16 %v579
        %v616 = vunpack.c.l.b16 %v580
        %v617 = vunpack.c.l.b16 %v581
        %v618 = vunpack.c.l.b16 %v582
        %v619 = vunpack.c.l.b16 %v583
        %v620 = vunpack.c.l.b16 %v584
        %v621 = vunpack.c.l.b16 %v585
        %v622 = vunpack.c.l.b16 %v586
        %v623 = vunpack.c.l.b16 %v587
        %v624 = vpack.c.b16 %v609, %v608
        %v625 = vpack.c.b16 %v611, %v610
        %v626 = vpack.c.b16 %v613, %v612
        %v627 = vpack.c.b16 %v615, %v614
        %v628 = vpack.c.b16 %v617, %v616
        %v629 = vpack.c.b16 %v619, %v618
        %v630 = vpack.c.b16 %v621, %v620
        %v631 = vpack.c.b16 %v623, %v622
        %640 = vmatpush.bf16.msra.mxu0 %v631
        %641 = vmatpush.bf16.msra.mxu0 %v630
        %642 = vmatpush.bf16.msra.mxu0 %v629
        %643 = vmatpush.bf16.msra.mxu0 %v628
        %644 = vmatpush.bf16.msra.mxu0 %v627
        %645 = vmatpush.bf16.msra.mxu0 %v626
        %646 = vmatpush.bf16.msra.mxu0 %v625
        %647 = vmatpush.bf16.msra.mxu0 %v624
        %648 = vmatmul.bf16.gmra.mxu0 %v427
        %v649 = vpop.f32.mrf.mxu0
        %v650 = vadd.f32 %v590, %v649
        %v651 = vpop.f32.mrf.mxu0
        %v652 = vadd.f32 %v590, %v651
        %653 = vmatmul.bf16.gmra.mxu0 %v428
        %v654 = vpop.f32.mrf.mxu0
        %v655 = vadd.f32 %v590, %v654
        %v656 = vpop.f32.mrf.mxu0
        %v657 = vadd.f32 %v590, %v656
        %658 = vmatmul.bf16.gmra.mxu0 %v429
        %v659 = vpop.f32.mrf.mxu0
        %v660 = vadd.f32 %v590, %v659
        %v661 = vpop.f32.mrf.mxu0
        %v662 = vadd.f32 %v590, %v661
        %663 = vmatmul.bf16.gmra.mxu0 %v430
        %v664 = vpop.f32.mrf.mxu0
        %v665 = vadd.f32 %v590, %v664
        %v666 = vpop.f32.mrf.mxu0
        %v667 = vadd.f32 %v590, %v666
        %668 = vmatmul.bf16.gmra.mxu0 %v431
        %v669 = vpop.f32.mrf.mxu0
        %v670 = vadd.f32 %v590, %v669
        %v671 = vpop.f32.mrf.mxu0
        %v672 = vadd.f32 %v590, %v671
        %673 = vmatmul.bf16.gmra.mxu0 %v432
        %v674 = vpop.f32.mrf.mxu0
        %v675 = vadd.f32 %v590, %v674
        %v676 = vpop.f32.mrf.mxu0
        %v677 = vadd.f32 %v590, %v676
        %678 = vmatmul.bf16.gmra.mxu0 %v433
        %v679 = vpop.f32.mrf.mxu0
        %v680 = vadd.f32 %v590, %v679
        %v681 = vpop.f32.mrf.mxu0
        %v682 = vadd.f32 %v590, %v681
        %683 = vmatmul.bf16.gmra.mxu0 %v434
        %v684 = vpop.f32.mrf.mxu0
        %v685 = vadd.f32 %v590, %v684
        %v686 = vpop.f32.mrf.mxu0
        %v687 = vadd.f32 %v590, %v686
        %688 = vdwg.mxu0
        %v689 = vmax.f32 %v650, 0.0
        %v690 = vmax.f32 %v652, 0.0
        %v691 = vmax.f32 %v655, 0.0
        %v692 = vmax.f32 %v657, 0.0
        %v693 = vmax.f32 %v660, 0.0
        %v694 = vmax.f32 %v662, 0.0
        %v695 = vmax.f32 %v665, 0.0
        %v696 = vmax.f32 %v667, 0.0
        %v697 = vmax.f32 %v670, 0.0
        %v698 = vmax.f32 %v672, 0.0
        %v699 = vmax.f32 %v675, 0.0
        %v700 = vmax.f32 %v677, 0.0
        %v701 = vmax.f32 %v680, 0.0
        %v702 = vmax.f32 %v682, 0.0
        %v703 = vmax.f32 %v685, 0.0
        %v704 = vmax.f32 %v687, 0.0
        %v705 = vpack.c.bf16 %v690, %v689
        %v706 = vpack.c.bf16 %v692, %v691
        %v707 = vpack.c.bf16 %v694, %v693
        %v708 = vpack.c.bf16 %v696, %v695
        %v709 = vpack.c.bf16 %v698, %v697
        %v710 = vpack.c.bf16 %v700, %v699
        %v711 = vpack.c.bf16 %v702, %v701
        %v712 = vpack.c.bf16 %v704, %v703
        %v713 = vld [vmem:[#allocation8] sm:$0xf]
        %v714 = vld [vmem:[#allocation8 + $0x4] sm:$0xf]
        %v715 = vld [vmem:[#allocation8 + $0x8] sm:$0xf]
        %v716 = vld [vmem:[#allocation8 + $0xc] sm:$0xf]
        %v717 = vld [vmem:[#allocation8 + $0x10] sm:$0xf]
        %v718 = vld [vmem:[#allocation8 + $0x14] sm:$0xf]
        %v719 = vld [vmem:[#allocation8 + $0x18] sm:$0xf]
        %v720 = vld [vmem:[#allocation8 + $0x1c] sm:$0xf]
        %v721 = vld [vmem:[#allocation8 + $0x20] sm:$0xf]
        %v722 = vld [vmem:[#allocation8 + $0x24] sm:$0xf]
        %v723 = vld [vmem:[#allocation8 + $0x28] sm:$0xf]
        %v724 = vld [vmem:[#allocation8 + $0x2c] sm:$0xf]
        %v725 = vld [vmem:[#allocation8 + $0x30] sm:$0xf]
        %v726 = vld [vmem:[#allocation8 + $0x34] sm:$0xf]
        %v727 = vld [vmem:[#allocation8 + $0x38] sm:$0xf]
        %v728 = vld [vmem:[#allocation8 + $0x3c] sm:$0xf]
        %v729 = vld [vmem:[%s5] sm:$0x1]
        %v731 = vperm.slane %v729, 0
        %v749 = vunpack.c.l.b16 %v713
        %v750 = vunpack.c.l.b16 %v714
        %v751 = vunpack.c.l.b16 %v715
        %v752 = vunpack.c.l.b16 %v716
        %v753 = vunpack.c.l.b16 %v717
        %v754 = vunpack.c.l.b16 %v718
        %v755 = vunpack.c.l.b16 %v719
        %v756 = vunpack.c.l.b16 %v720
        %v757 = vunpack.c.l.b16 %v721
        %v758 = vunpack.c.l.b16 %v722
        %v759 = vunpack.c.l.b16 %v723
        %v760 = vunpack.c.l.b16 %v724
        %v761 = vunpack.c.l.b16 %v725
        %v762 = vunpack.c.l.b16 %v726
        %v763 = vunpack.c.l.b16 %v727
        %v764 = vunpack.c.l.b16 %v728
        %v765 = vpack.c.b16 %v750, %v749
        %v766 = vpack.c.b16 %v752, %v751
        %v767 = vpack.c.b16 %v754, %v753
        %v768 = vpack.c.b16 %v756, %v755
        %v769 = vpack.c.b16 %v758, %v757
        %v770 = vpack.c.b16 %v760, %v759
        %v771 = vpack.c.b16 %v762, %v761
        %v772 = vpack.c.b16 %v764, %v763
        %781 = vmatpush.bf16.msra.mxu0 %v772
        %782 = vmatpush.bf16.msra.mxu0 %v771
        %783 = vmatpush.bf16.msra.mxu0 %v770
        %784 = vmatpush.bf16.msra.mxu0 %v769
        %785 = vmatpush.bf16.msra.mxu0 %v768
        %786 = vmatpush.bf16.msra.mxu0 %v767
        %787 = vmatpush.bf16.msra.mxu0 %v766
        %788 = vmatpush.bf16.msra.mxu0 %v765
        %789 = vmatmul.bf16.gmra.mxu0 %v705
        %v790 = vpop.f32.mrf.mxu0
        %v791 = vadd.f32 %v731, %v790
        %v792 = vpop.f32.mrf.mxu0
        %v793 = vadd.f32 %v731, %v792
        %794 = vmatmul.bf16.gmra.mxu0 %v706
        %v795 = vpop.f32.mrf.mxu0
        %v796 = vadd.f32 %v731, %v795
        %v797 = vpop.f32.mrf.mxu0
        %v798 = vadd.f32 %v731, %v797
        %799 = vmatmul.bf16.gmra.mxu0 %v707
        %v800 = vpop.f32.mrf.mxu0
        %v801 = vadd.f32 %v731, %v800
        %v802 = vpop.f32.mrf.mxu0
        %v803 = vadd.f32 %v731, %v802
        %804 = vmatmul.bf16.gmra.mxu0 %v708
        %v805 = vpop.f32.mrf.mxu0
        %v806 = vadd.f32 %v731, %v805
        %v807 = vpop.f32.mrf.mxu0
        %v808 = vadd.f32 %v731, %v807
        %809 = vmatmul.bf16.gmra.mxu0 %v709
        %v810 = vpop.f32.mrf.mxu0
        %v811 = vadd.f32 %v731, %v810
        %v812 = vpop.f32.mrf.mxu0
        %v813 = vadd.f32 %v731, %v812
        %814 = vmatmul.bf16.gmra.mxu0 %v710
        %v815 = vpop.f32.mrf.mxu0
        %v816 = vadd.f32 %v731, %v815
        %v817 = vpop.f32.mrf.mxu0
        %v818 = vadd.f32 %v731, %v817
        %819 = vmatmul.bf16.gmra.mxu0 %v711
        %v820 = vpop.f32.mrf.mxu0
        %v821 = vadd.f32 %v731, %v820
        %v822 = vpop.f32.mrf.mxu0
        %v823 = vadd.f32 %v731, %v822
        %824 = vmatmul.bf16.gmra.mxu0 %v712
        %v825 = vpop.f32.mrf.mxu0
        %v826 = vadd.f32 %v731, %v825
        %v827 = vpop.f32.mrf.mxu0
        %v828 = vadd.f32 %v731, %v827
        %829 = vdwg.mxu0
        %v830 = vmax.f32 %v791, 0.0
        %v831 = vmax.f32 %v793, 0.0
        %v832 = vmax.f32 %v796, 0.0
        %v833 = vmax.f32 %v798, 0.0
        %v834 = vmax.f32 %v801, 0.0
        %v835 = vmax.f32 %v803, 0.0
        %v836 = vmax.f32 %v806, 0.0
        %v837 = vmax.f32 %v808, 0.0
        %v838 = vmax.f32 %v811, 0.0
        %v839 = vmax.f32 %v813, 0.0
        %v840 = vmax.f32 %v816, 0.0
        %v841 = vmax.f32 %v818, 0.0
        %v842 = vmax.f32 %v821, 0.0
        %v843 = vmax.f32 %v823, 0.0
        %v844 = vmax.f32 %v826, 0.0
        %v845 = vmax.f32 %v828, 0.0
        %v846 = vpack.c.bf16 %v830, %v830
        %v847 = vpack.c.bf16 %v831, %v831
        %v848 = vpack.c.bf16 %v832, %v832
        %v849 = vpack.c.bf16 %v833, %v833
        %v850 = vpack.c.bf16 %v834, %v834
        %v851 = vpack.c.bf16 %v835, %v835
        %v852 = vpack.c.bf16 %v836, %v836
        %v853 = vpack.c.bf16 %v837, %v837
        %v854 = vpack.c.bf16 %v838, %v838
        %v855 = vpack.c.bf16 %v839, %v839
        %v856 = vpack.c.bf16 %v840, %v840
        %v857 = vpack.c.bf16 %v841, %v841
        %v858 = vpack.c.bf16 %v842, %v842
        %v859 = vpack.c.bf16 %v843, %v843
        %v860 = vpack.c.bf16 %v844, %v844
        %v861 = vpack.c.bf16 %v845, %v845
        %862 = vst [vmem:[%s359] sm:$0xf] %v846
        %863 = vst [vmem:[%s359 + $0x4] sm:$0xf] %v847
        %864 = vst [vmem:[%s359 + $0x8] sm:$0xf] %v848
        %865 = vst [vmem:[%s359 + $0xc] sm:$0xf] %v849
        %866 = vst [vmem:[%s359 + $0x10] sm:$0xf] %v850
        %867 = vst [vmem:[%s359 + $0x14] sm:$0xf] %v851
        %868 = vst [vmem:[%s359 + $0x18] sm:$0xf] %v852
        %869 = vst [vmem:[%s359 + $0x1c] sm:$0xf] %v853
        %870 = vst [vmem:[%s359 + $0x20] sm:$0xf] %v854
        %871 = vst [vmem:[%s359 + $0x24] sm:$0xf] %v855
        %872 = vst [vmem:[%s359 + $0x28] sm:$0xf] %v856
        %873 = vst [vmem:[%s359 + $0x2c] sm:$0xf] %v857
        %874 = vst [vmem:[%s359 + $0x30] sm:$0xf] %v858
        %875 = vst [vmem:[%s359 + $0x34] sm:$0xf] %v859
        %876 = vst [vmem:[%s359 + $0x38] sm:$0xf] %v860
        %877 = vst [vmem:[%s359 + $0x3c] sm:$0xf] %v861
        %s878 = sand.u32 %s169, 1
        %s879 = scalar_lea.sflag [#allocation4], %s878
        %s880 = sand.u32 %s169, 1
        %s881 = smul.addr %s880, 64
        %s882 = scalar_lea.vmem [#allocation10], %s881
        %s883 = sand.u32 %s195, 1
        %s884 = scalar_lea.sflag [#allocation12], %s883
        %s885 = sand.u32 %s195, 1
        %s886 = smul.addr %s885, 64
        %s887 = scalar_lea.vmem [#allocation11], %s886
        // Predicated region
        $region61: #{tpu_custom_call.1} parent=43 // pred_check
          %p888 = pneg %p179
        $region62: #{tpu_custom_call.1} parent=43 // pred_check_branch
          %890 = sbr.rel (%p888) target = $region64
        $region63: #{tpu_custom_call.1} parent=43 // pred_region
          %s891 = smul.u32 16, %s30
          %893 = vsyncadd %s879, 0
          %s894 = smul.addr %s891, 4
          %s895 = scalar_lea.hbm %s6, %s894
          %s896 = sshll.u32 %s882, 4
          %s897 = int_to_ptr.vmem [resolvable:$true] %s896
          %s898 = sshll.u32 %s895, 4
          %s899 = int_to_ptr.hbm [resolvable:$true] %s898
          %904 = dma.vmem_to_hbm [thread:$0]  %s897, 1024, %s899, %s879, 64, 64, 4
        $region64: #{tpu_custom_call.1} parent=43 // pred_fallthru
          _
        // Predicated region
        $region65: #{tpu_custom_call.1} parent=43 // pred_check
          %p905 = pneg %p205
        $region66: #{tpu_custom_call.1} parent=43 // pred_check_branch
          %907 = sbr.rel (%p905) target = $region68
        $region67: #{tpu_custom_call.1} parent=43 // pred_region
          %s908 = smul.u32 16, %s30
          %910 = vsyncadd %s884, 0
          %s911 = smul.addr %s908, 4
          %s912 = scalar_lea.hbm %s7, %s911
          %s913 = sshll.u32 %s887, 4
          %s914 = int_to_ptr.vmem [resolvable:$true] %s913
          %s915 = sshll.u32 %s912, 4
          %s916 = int_to_ptr.hbm [resolvable:$true] %s915
          %921 = dma.vmem_to_hbm [thread:$0]  %s914, 1024, %s916, %s884, 64, 64, 4
        $region68: #{tpu_custom_call.1} parent=43 // pred_fallthru
          _
      $region44: #{tpu_custom_call.1} parent=5 // pred_fallthru
        _
      %p922 = scmp.le.s32.totalorder 2, %s25
      // Predicated region
      $region69: #{tpu_custom_call.1} parent=5 // pred_check
        %p923 = pneg %p922
      $region70: #{tpu_custom_call.1} parent=5 // pred_check_branch
        %925 = sbr.rel (%p923) target = $region72
      $region71: #{tpu_custom_call.1} parent=5 // pred_region
        %s926 = ssub.s32 %s25, 2
        // Predicated region
        $region73: #{tpu_custom_call.1} parent=71 // pred_check
          %p927 = pneg %p185
        $region74: #{tpu_custom_call.1} parent=71 // pred_check_branch
          %929 = sbr.rel (%p927) target = $region76
        $region75: #{tpu_custom_call.1} parent=71 // pred_region
          %s930 = sand.u32 %s170, 1
          %s931 = scalar_lea.sflag [#allocation4], %s930
          %s932 = sand.u32 %s170, 1
          %s933 = smul.addr %s932, 64
          %s934 = scalar_lea.vmem [#allocation10], %s933
          %936 = dma.done %s931, 1024
        $region76: #{tpu_custom_call.1} parent=71 // pred_fallthru
          _
        // Predicated region
        $region77: #{tpu_custom_call.1} parent=71 // pred_check
          %p937 = pneg %p211
        $region78: #{tpu_custom_call.1} parent=71 // pred_check_branch
          %939 = sbr.rel (%p937) target = $region80
        $region79: #{tpu_custom_call.1} parent=71 // pred_region
          %s940 = sand.u32 %s196, 1
          %s941 = scalar_lea.sflag [#allocation12], %s940
          %s942 = sand.u32 %s196, 1
          %s943 = smul.addr %s942, 64
          %s944 = scalar_lea.vmem [#allocation11], %s943
          %946 = dma.done %s941, 1024
        $region80: #{tpu_custom_call.1} parent=71 // pred_fallthru
          _
      $region72: #{tpu_custom_call.1} parent=5 // pred_fallthru
        _
    $region6: #{tpu_custom_call.1} parent=1 // loop_footer
      %s29 = sadd.s32 1, %s25
    $region7: #{tpu_custom_call.1} parent=1 // loop_footer_branch
      %24 = sbr.rel target = $region3
    $region8: #{tpu_custom_call.1} parent=1 // loop_exit
      _
    %947 = vsyncpa [#allocation3], 1
    %s948 = scalar_lea.sflag [#allocation3], 1
    %949 = vsyncpa %s948, 1
    %950 = vsyncpa [#allocation6], 1
    %951 = vsyncpa [#allocation9], 1
    %952 = vsyncpa [#allocation4], 1
    %s953 = scalar_lea.sflag [#allocation4], 1
    %954 = vsyncpa %s953, 1
    %955 = vsyncpa [#allocation12], 1
    %s956 = scalar_lea.sflag [#allocation12], 1
    %957 = vsyncpa %s956, 1

</llo_original>
